<compile_context>
chip_gen: v5e
topology: v5e:2x2
jax: 0.10.0
libtpu: 0.0.40
codegen_flags: <defaults>
</compile_context>

<pallas_src>
import functools

import jax
import jax.numpy as jnp
from jax import lax
from jax.experimental import pallas as pl
from jax.experimental.pallas import tpu as pltpu


def _round_up(x, m):
    return ((x + m - 1) // m) * m


# ---------------------------------------------------------------------------
# Grouped forward (task_labels tensor path)
# ---------------------------------------------------------------------------
def _grouped_head_kernel(w_idx_ref, start_ref, count_ref,   # scalar prefetch (SMEM)
                         x_ref, w_ref, b_ref,               # VMEM input tiles
                         out_ref,                           # VMEM output tile (resident over t, k)
                         acc_ref,                           # f32 VMEM accumulator scratch
                         *, num_tasks):
    i = pl.program_id(0)        # batch tile
    t = pl.program_id(1)        # task
    k = pl.program_id(2)        # D (reduction) tile
    nk = pl.num_programs(2)

    cnt = count_ref[i * num_tasks + t]      # rows of task t inside this batch tile
    has_rows = cnt > 0
    first_k = k == 0
    last_k = k == nk - 1

    # Output tile is resident across the (t, k) axes; zero it once.
    @pl.when((t == 0) & first_k)
    def _init_out():
        out_ref[...] = jnp.zeros_like(out_ref)

    @pl.when(has_rows & first_k)
    def _init_acc():
        acc_ref[...] = jnp.zeros_like(acc_ref)

    # MXU work only for (tile, task) pairs that actually own rows.
    @pl.when(has_rows)
    def _accumulate():
        acc_ref[...] += jnp.dot(x_ref[...], w_ref[...],
                                preferred_element_type=jnp.float32)

    @pl.when(has_rows & last_k)
    def _write():
        y = acc_ref[...] + b_ref[...]                      # (TB, Cp) + (1, Cp)
        start = start_ref[i * num_tasks + t]
        row = lax.broadcasted_iota(jnp.int32, out_ref.shape, 0)
        in_group = (row >= start) & (row < start + cnt)    # rows are task-sorted -> contiguous
        out_ref[...] = jnp.where(in_group, y, out_ref[...])


def multitask_forward(x, task_labels, weights, biases, *,
                      compute_dtype=jnp.bfloat16, block_b=256, block_d=512):
    """Pallas implementation of MultiTaskModule.forward (tensor task_labels).

    x:            (B, D)    float
    task_labels:  (B,)      int   (a Python int is also accepted)
    weights:      (T, D, C) float -- per-task heads, zero-padded to C = max_class_label
    biases:       (T, C)    float -- zero-padded to C
    returns:      (B, C)    float32
    """
    if isinstance(task_labels, int):
        # PyTorch's forward_single_task path (output reported at max_class_label width).
        task_labels = jnp.full((x.shape[0],), task_labels, dtype=jnp.int32)

    B, D = x.shape
    T, _, C = weights.shape

    # ---- lane/sublane-aligned padded sizes --------------------------------
    Cp = _round_up(C, 128)                     # lane-dense output / MXU N
    tb = min(_round_up(B, 8), block_b)         # batch tile (sublane multiple)
    Bp = _round_up(B, tb)
    n_bt = Bp // tb
    Dp = _round_up(D, 128)
    if Dp > block_d:
        Dp = _round_up(Dp, block_d)
        td = block_d
    else:
        td = Dp
    n_kt = Dp // td

    # ---- cheap JAX pre-pass: sort rows by task, build SMEM tables ----------
    labels = jnp.asarray(task_labels, dtype=jnp.int32)
    pad_rows = Bp - B
    labels_p = (jnp.concatenate([labels, jnp.full((pad_rows,), T, dtype=jnp.int32)])
                if pad_rows else labels)
    x_p = jnp.pad(x.astype(jnp.float32), ((0, pad_rows), (0, Dp - D)))
    sort_idx = jnp.argsort(labels_p)
    x_sorted = x_p[sort_idx].astype(compute_dtype)
    sl = labels_p[sort_idx].reshape(n_bt, tb)

    onehot = sl[:, :, None] == jnp.arange(T, dtype=jnp.int32)[None, None, :]  # (n_bt, tb, T)
    counts = onehot.sum(axis=1).astype(jnp.int32)                             # rows per (tile, task)
    starts = jnp.argmax(onehot, axis=1).astype(jnp.int32)                     # first row of task t in tile
    # Carry the last *used* weight index forward over empty (tile, task) slots so
    # Pallas sees an unchanged block index and skips the weight DMA entirely.
    present = (counts > 0).reshape(-1)
    flat_t = jnp.broadcast_to(jnp.arange(T, dtype=jnp.int32)[None, :], (n_bt, T)).reshape(-1)
    pos = jnp.arange(present.size, dtype=jnp.int32)
    last_pos = lax.cummax(jnp.where(present, pos, -1), axis=0)
    w_idx = jnp.where(last_pos >= 0, flat_t[jnp.maximum(last_pos, 0)], 0).astype(jnp.int32)
    starts_flat = starts.reshape(-1)
    counts_flat = counts.reshape(-1)

    # ---- padded / cast parameters ------------------------------------------
    w_pad = jnp.zeros((T, Dp, Cp), compute_dtype).at[:, :D, :C].set(
        weights.astype(compute_dtype))
    b_pad = jnp.zeros((T, 1, Cp), jnp.float32).at[:, 0, :C].set(
        biases.astype(jnp.float32))

    # ---- explicit VMEM budget (keeps the same code inside v7x's 64 MiB) ----
    isz = jnp.dtype(compute_dtype).itemsize
    vmem_est = (2 * tb * td * isz        # x tile, double buffered
                + 2 * td * Cp * isz      # W tile, double buffered
                + 2 * Cp * 4             # bias
                + 2 * tb * Cp * 4        # resident output
                + tb * Cp * 4)           # accumulator scratch
    vmem_limit = int(min(max(2 * vmem_est, 32 * 1024 * 1024), 64 * 1024 * 1024))

    kernel = functools.partial(_grouped_head_kernel, num_tasks=T)

    out_sorted = pl.pallas_call(
        kernel,
        out_shape=jax.ShapeDtypeStruct((Bp, Cp), jnp.float32),
        grid_spec=pltpu.PrefetchScalarGridSpec(
            num_scalar_prefetch=3,
            grid=(n_bt, T, n_kt),
            in_specs=[
                pl.BlockSpec((tb, td), lambda i, t, k, wi, st, cn: (i, k)),
                pl.BlockSpec((pl.Squeezed(), td, Cp),
                             lambda i, t, k, wi, st, cn: (wi[i * T + t], k, 0)),
                pl.BlockSpec((pl.Squeezed(), 1, Cp),
                             lambda i, t, k, wi, st, cn: (wi[i * T + t], 0, 0)),
            ],
            out_specs=pl.BlockSpec((tb, Cp), lambda i, t, k, wi, st, cn: (i, 0)),
            scratch_shapes=[pltpu.VMEM((tb, Cp), jnp.float32)],
        ),
        compiler_params=pltpu.CompilerParams(
            dimension_semantics=("parallel", "arbitrary", "arbitrary"),
            vmem_limit_bytes=vmem_limit,
        ),
        cost_estimate=pl.CostEstimate(
            flops=2 * Bp * Dp * Cp,
            transcendentals=0,
            bytes_accessed=(Bp * Dp + T * Dp * Cp) * isz + Bp * Cp * 4,
        ),
    )(w_idx, starts_flat, counts_flat, x_sorted, w_pad, b_pad)

    # Undo the task-sort and strip batch/class padding.
    inv = jnp.argsort(sort_idx)
    return out_sorted[inv][:B, :C]


# ---------------------------------------------------------------------------
# forward_all_tasks (task_labels is None path)
# ---------------------------------------------------------------------------
def _all_tasks_kernel(x_ref, w_ref, b_ref, out_ref, acc_ref):
    k = pl.program_id(2)

    @pl.when(k == 0)
    def _init():
        acc_ref[...] = jnp.zeros_like(acc_ref)

    acc_ref[...] += jnp.dot(x_ref[...], w_ref[...],
                            preferred_element_type=jnp.float32)

    @pl.when(k == pl.num_programs(2) - 1)
    def _write():
        out_ref[0] = (acc_ref[...] + b_ref[...]).astype(out_ref.dtype)


def multitask_forward_all_tasks(x, known_tasks, weights, biases, *,
                                compute_dtype=jnp.bfloat16, block_b=256, block_d=512):
    """forward_all_tasks: dict {task_id: head_t(x)} from a single pallas_call."""
    B, D = x.shape
    T, _, C = weights.shape
    Cp = _round_up(C, 128)
    tb = min(_round_up(B, 8), block_b)
    Bp = _round_up(B, tb)
    n_bt = Bp // tb
    Dp = _round_up(D, 128)
    if Dp > block_d:
        Dp = _round_up(Dp, block_d)
        td = block_d
    else:
        td = Dp
    n_kt = Dp // td

    x_p = jnp.pad(x.astype(jnp.float32), ((0, Bp - B), (0, Dp - D))).astype(compute_dtype)
    w_pad = jnp.zeros((T, Dp, Cp), compute_dtype).at[:, :D, :C].set(
        weights.astype(compute_dtype))
    b_pad = jnp.zeros((T, 1, Cp), jnp.float32).at[:, 0, :C].set(
        biases.astype(jnp.float32))

    isz = jnp.dtype(compute_dtype).itemsize
    vmem_est = (2 * tb * td * isz + 2 * td * Cp * isz + 2 * Cp * 4
                + 2 * tb * Cp * 4 + tb * Cp * 4)
    vmem_limit = int(min(max(2 * vmem_est, 32 * 1024 * 1024), 64 * 1024 * 1024))

    out = pl.pallas_call(
        _all_tasks_kernel,
        out_shape=jax.ShapeDtypeStruct((T, Bp, Cp), jnp.float32),
        grid_spec=pltpu.PrefetchScalarGridSpec(
            num_scalar_prefetch=0,
            grid=(n_bt, T, n_kt),
            in_specs=[
                pl.BlockSpec((tb, td), lambda i, t, k: (i, k)),
                pl.BlockSpec((pl.Squeezed(), td, Cp), lambda i, t, k: (t, k, 0)),
                pl.BlockSpec((pl.Squeezed(), 1, Cp), lambda i, t, k: (t, 0, 0)),
            ],
            out_specs=pl.BlockSpec((1, tb, Cp), lambda i, t, k: (t, i, 0)),
            scratch_shapes=[pltpu.VMEM((tb, Cp), jnp.float32)],
        ),
        compiler_params=pltpu.CompilerParams(
            dimension_semantics=("parallel", "arbitrary", "arbitrary"),
            vmem_limit_bytes=vmem_limit,
        ),
    )(x_p, w_pad, b_pad)

    return {int(t): out[int(t), :B, :C] for t in known_tasks}


# ---------------------------------------------------------------------------
# Pure-JAX reference (mirrors the PyTorch loop over unique tasks)
# ---------------------------------------------------------------------------
def _reference_forward(x, task_labels, head_sizes, weights, biases):
    B = x.shape[0]
    C = weights.shape[-1]
    out = jnp.zeros((B, C), dtype=jnp.float32)
    for t in range(weights.shape[0]):
        n = head_sizes[t]
        y = x @ weights[t, :, :n] + biases[t, :n]
        mask = (task_labels == t)[:, None]
        y_pad = jnp.pad(y, ((0, 0), (0, C - n)))
        out = jnp.where(mask, y_pad, out)
    return out


if __name__ == "__main__":
    key = jax.random.PRNGKey(0)

    B, D = 8, 32
    T = 3
    head_sizes = [5, 7, 6]            # classes per task head
    C = max(head_sizes)               # max_class_label tracked by MultiTaskModule.adaptation

    k_x, k_w, k_b, k_t = jax.random.split(key, 4)
    x = jax.random.normal(k_x, (B, D), dtype=jnp.float32)
    task_labels = jax.random.randint(k_t, (B,), 0, T, dtype=jnp.int32)

    # Deterministic per-task head parameters, zero-padded to max_class_label.
    w_full = jax.random.normal(k_w, (T, D, C), dtype=jnp.float32) * 0.1
    b_full = jax.random.normal(k_b, (T, C), dtype=jnp.float32) * 0.1
    col = jnp.arange(C)
    pad_mask = (col[None, :] < jnp.asarray(head_sizes)[:, None]).astype(jnp.float32)
    weights = w_full * pad_mask[:, None, :]
    biases = b_full * pad_mask

    ref = _reference_forward(x, task_labels, head_sizes, weights, biases)

    # f32 path: exact vs reference.
    out_f32 = jax.block_until_ready(
        multitask_forward(x, task_labels, weights, biases, compute_dtype=jnp.float32))
    assert out_f32.shape == (B, C)
    assert jnp.allclose(out_f32, ref, atol=1e-5, rtol=1e-5), "f32 mismatch vs reference"

    # bf16 MXU path (v6e/v7x throughput; f32 accumulation & output).
    out_bf16 = jax.block_until_ready(
        multitask_forward(x, task_labels, weights, biases, compute_dtype=jnp.bfloat16))
    assert jnp.allclose(out_bf16, ref, atol=5e-2, rtol=5e-2), "bf16 mismatch vs reference"

    # forward_all_tasks path (task_labels is None in PyTorch): single kernel call.
    all_out = multitask_forward_all_tasks(x, range(T), weights, biases,
                                          compute_dtype=jnp.float32)
    for t in range(T):
        exp = x @ weights[t] + biases[t]
        assert jnp.allclose(all_out[t], exp, atol=1e-5, rtol=1e-5), f"all_tasks mismatch task {t}"
    jax.block_until_ready(all_out[0])

    # TODO(synk): adaptation()/train_adaptation()/eval_adaptation() are python
    # bookkeeping (set / max_class_label updates), not tensor compute; omitted.
    print("KERNEL_OK")
</pallas_src>

<mosaic_0001>
module attributes {stable_mosaic.version = 11 : i64} {
  func.func @_grouped_head_kernel(%arg0: i32, %arg1: i32, %arg2: i32, %arg3: memref<3xi32, #tpu.memory_space<smem>>, %arg4: memref<3xi32, #tpu.memory_space<smem>>, %arg5: memref<3xi32, #tpu.memory_space<smem>>, %arg6: memref<8x128xf32, #tpu.memory_space<vmem>>, %arg7: memref<1x128x128xf32, #tpu.memory_space<vmem>>, %arg8: memref<1x1x128xf32, #tpu.memory_space<vmem>>, %arg9: memref<8x128xf32, #tpu.memory_space<vmem>>, %arg10: memref<8x128xf32, #tpu.memory_space<vmem>>) attributes {dimension_semantics = [#tpu.dimension_semantics<parallel>, #tpu.dimension_semantics<arbitrary>, #tpu.dimension_semantics<arbitrary>], iteration_bounds = array<i64: 1, 3, 1>, scalar_prefetch = 3 : i64, scratch_operands = 1 : i64, tpu.core_type = #tpu.core_type<tc>, window_params = [{transform_indices = @transform_0, window_bounds = array<i64: 8, 128>}, {transform_indices = @transform_1, window_bounds = array<i64: 1, 128, 128>}, {transform_indices = @transform_2, window_bounds = array<i64: 1, 1, 128>}, {transform_indices = @transform_3, window_bounds = array<i64: 8, 128>}]} {
    %c3_i32 = arith.constant 3 : i32
    %0 = arith.muli %arg0, %c3_i32 : i32
    %1 = arith.addi %0, %arg1 : i32
    %2 = arith.index_cast %1 : i32 to index
    %3 = memref.load %arg5[%2] : memref<3xi32, #tpu.memory_space<smem>>
    %c0_i32 = arith.constant 0 : i32
    %4 = arith.cmpi sgt, %3, %c0_i32 : i32
    %c0_i32_0 = arith.constant 0 : i32
    %5 = arith.cmpi eq, %arg2, %c0_i32_0 : i32
    %c0_i32_1 = arith.constant 0 : i32
    %6 = arith.cmpi eq, %arg2, %c0_i32_1 : i32
    %c0_i32_2 = arith.constant 0 : i32
    %7 = arith.cmpi eq, %arg1, %c0_i32_2 : i32
    %8 = arith.andi %7, %5 : i1
    %9 = arith.extui %8 : i1 to i32
    %c0_i32_3 = arith.constant 0 : i32
    %10 = arith.cmpi ne, %9, %c0_i32_3 : i32
    scf.if %10 {
      %cst = arith.constant 0.000000e+00 : f32
      %19 = vector.broadcast %cst : f32 to vector<8x128xf32>
      %c0 = arith.constant 0 : index
      %c0_7 = arith.constant 0 : index
      %20 = vector.load %arg9[%c0, %c0_7] : memref<8x128xf32, #tpu.memory_space<vmem>>, vector<8x128xf32>
      tpu.vector_store %arg9[%c0, %c0_7], %19 {strides = array<i32>} : memref<8x128xf32, #tpu.memory_space<vmem>>, vector<8x128xf32>,
    } else {
    }
    %11 = arith.andi %4, %5 : i1
    %12 = arith.extui %11 : i1 to i32
    %c0_i32_4 = arith.constant 0 : i32
    %13 = arith.cmpi ne, %12, %c0_i32_4 : i32
    scf.if %13 {
      %cst = arith.constant 0.000000e+00 : f32
      %19 = vector.broadcast %cst : f32 to vector<8x128xf32>
      %c0 = arith.constant 0 : index
      %c0_7 = arith.constant 0 : index
      %20 = vector.load %arg10[%c0, %c0_7] : memref<8x128xf32, #tpu.memory_space<vmem>>, vector<8x128xf32>
      tpu.vector_store %arg10[%c0, %c0_7], %19 {strides = array<i32>} : memref<8x128xf32, #tpu.memory_space<vmem>>, vector<8x128xf32>,
    } else {
    }
    %14 = arith.extui %4 : i1 to i32
    %c0_i32_5 = arith.constant 0 : i32
    %15 = arith.cmpi ne, %14, %c0_i32_5 : i32
    scf.if %15 {
      %c0 = arith.constant 0 : index
      %c0_7 = arith.constant 0 : index
      %19 = vector.load %arg10[%c0, %c0_7] : memref<8x128xf32, #tpu.memory_space<vmem>>, vector<8x128xf32>
      %c0_8 = arith.constant 0 : index
      %c0_9 = arith.constant 0 : index
      %20 = vector.load %arg6[%c0_8, %c0_9] : memref<8x128xf32, #tpu.memory_space<vmem>>, vector<8x128xf32>
      %c0_10 = arith.constant 0 : index
      %c0_11 = arith.constant 0 : index
      %c0_12 = arith.constant 0 : index
      %21 = vector.load %arg7[%c0_10, %c0_11, %c0_12] : memref<1x128x128xf32, #tpu.memory_space<vmem>>, vector<1x128x128xf32>
      %22 = vector.shape_cast %21 : vector<1x128x128xf32> to vector<128x128xf32>
      %cst = arith.constant dense<0.000000e+00> : vector<8x128xf32>
      %23 = tpu.matmul %20, %22, %cst {dimension_numbers = #tpu.dot_dimension_numbers<[1], [0], [0], [1], [0, 0, 1, 1], [], []>} : vector<8x128xf32>, vector<128x128xf32>, vector<8x128xf32> -> vector<8x128xf32>
      %24 = arith.addf %19, %23 : vector<8x128xf32>
      %c0_13 = arith.constant 0 : index
      %c0_14 = arith.constant 0 : index
      %25 = vector.load %arg10[%c0_13, %c0_14] : memref<8x128xf32, #tpu.memory_space<vmem>>, vector<8x128xf32>
      tpu.vector_store %arg10[%c0_13, %c0_14], %24 {strides = array<i32>} : memref<8x128xf32, #tpu.memory_space<vmem>>, vector<8x128xf32>,
    } else {
    }
    %16 = arith.andi %4, %6 : i1
    %17 = arith.extui %16 : i1 to i32
    %c0_i32_6 = arith.constant 0 : i32
    %18 = arith.cmpi ne, %17, %c0_i32_6 : i32
    scf.if %18 {
      %c0 = arith.constant 0 : index
      %c0_7 = arith.constant 0 : index
      %19 = vector.load %arg10[%c0, %c0_7] : memref<8x128xf32, #tpu.memory_space<vmem>>, vector<8x128xf32>
      %c0_8 = arith.constant 0 : index
      %c0_9 = arith.constant 0 : index
      %c0_10 = arith.constant 0 : index
      %20 = vector.load %arg8[%c0_8, %c0_9, %c0_10] : memref<1x1x128xf32, #tpu.memory_space<vmem>>, vector<1x1x128xf32>
      %21 = vector.shape_cast %20 : vector<1x1x128xf32> to vector<1x128xf32>
      %22 = vector.broadcast %21 : vector<1x128xf32> to vector<8x128xf32>
      %23 = arith.addf %19, %22 : vector<8x128xf32>
      %c3_i32_11 = arith.constant 3 : i32
      %24 = arith.muli %arg0, %c3_i32_11 : i32
      %25 = arith.addi %24, %arg1 : i32
      %26 = arith.index_cast %25 : i32 to index
      %27 = memref.load %arg4[%26] : memref<3xi32, #tpu.memory_space<smem>>
      %28 = tpu.iota {dimensions = array<i32: 0>} : vector<8x128xi32>
      %29 = vector.broadcast %27 : i32 to vector<8x128xi32>
      %30 = arith.cmpi sge, %28, %29 : vector<8x128xi32>
      %31 = arith.addi %27, %3 : i32
      %32 = vector.broadcast %31 : i32 to vector<8x128xi32>
      %33 = arith.cmpi slt, %28, %32 : vector<8x128xi32>
      %34 = arith.andi %30, %33 : vector<8x128xi1>
      %c0_12 = arith.constant 0 : index
      %c0_13 = arith.constant 0 : index
      %35 = vector.load %arg9[%c0_12, %c0_13] : memref<8x128xf32, #tpu.memory_space<vmem>>, vector<8x128xf32>
      %36 = arith.select %34, %23, %35 : vector<8x128xi1>, vector<8x128xf32>
      %c0_14 = arith.constant 0 : index
      %c0_15 = arith.constant 0 : index
      %37 = vector.load %arg9[%c0_14, %c0_15] : memref<8x128xf32, #tpu.memory_space<vmem>>, vector<8x128xf32>
      tpu.vector_store %arg9[%c0_14, %c0_15], %36 {strides = array<i32>} : memref<8x128xf32, #tpu.memory_space<vmem>>, vector<8x128xf32>,
    } else {
    }
    return
  }
  func.func @transform_0(%arg0: i32, %arg1: i32, %arg2: i32, %arg3: memref<3xi32, #tpu.memory_space<smem>>, %arg4: memref<3xi32, #tpu.memory_space<smem>>, %arg5: memref<3xi32, #tpu.memory_space<smem>>) -> (i32, i32) {
    %c0_i32 = arith.constant 0 : i32
    return %arg0, %arg2 : i32, i32
  }
  func.func @transform_1(%arg0: i32, %arg1: i32, %arg2: i32, %arg3: memref<3xi32, #tpu.memory_space<smem>>, %arg4: memref<3xi32, #tpu.memory_space<smem>>, %arg5: memref<3xi32, #tpu.memory_space<smem>>) -> (i32, i32, i32) {
    %c3_i32 = arith.constant 3 : i32
    %0 = arith.muli %arg0, %c3_i32 : i32
    %1 = arith.addi %0, %arg1 : i32
    %2 = arith.index_cast %1 : i32 to index
    %3 = memref.load %arg3[%2] : memref<3xi32, #tpu.memory_space<smem>>
    %c0_i32 = arith.constant 0 : i32
    %c0_i32_0 = arith.constant 0 : i32
    return %3, %arg2, %c0_i32 : i32, i32, i32
  }
  func.func @transform_2(%arg0: i32, %arg1: i32, %arg2: i32, %arg3: memref<3xi32, #tpu.memory_space<smem>>, %arg4: memref<3xi32, #tpu.memory_space<smem>>, %arg5: memref<3xi32, #tpu.memory_space<smem>>) -> (i32, i32, i32) {
    %c3_i32 = arith.constant 3 : i32
    %0 = arith.muli %arg0, %c3_i32 : i32
    %1 = arith.addi %0, %arg1 : i32
    %2 = arith.index_cast %1 : i32 to index
    %3 = memref.load %arg3[%2] : memref<3xi32, #tpu.memory_space<smem>>
    %c0_i32 = arith.constant 0 : i32
    %c0_i32_0 = arith.constant 0 : i32
    %c0_i32_1 = arith.constant 0 : i32
    return %3, %c0_i32, %c0_i32_0 : i32, i32, i32
  }
  func.func @transform_3(%arg0: i32, %arg1: i32, %arg2: i32, %arg3: memref<3xi32, #tpu.memory_space<smem>>, %arg4: memref<3xi32, #tpu.memory_space<smem>>, %arg5: memref<3xi32, #tpu.memory_space<smem>>) -> (i32, i32) {
    %c0_i32 = arith.constant 0 : i32
    %c0_i32_0 = arith.constant 0 : i32
    return %arg0, %c0_i32 : i32, i32
  }
}

</mosaic_0001>

<llo_original>
// kernel: tpu_custom_call.1
$region0: #{tpu_custom_call.1}
  #allocation0 [shape = 'u32[]', space=smem, size = 0x4, offset = 0x4, fixed_abs, tag = 'smem constant byte address 0x4 - core index']
  #allocation1 [shape = 'u32[72,128]{1,0:T(1,128)}', space=vmem, size = 0x9000, scoped, tag = 'internal scratch']
  #allocation2 [shape = 'f32[8,128]{1,0:T(8,128)}', space=vmem, size = 0x1000, scoped, tag = 'scratch operand']
  #allocation3 [shape = 's32[1]{0}', space=sflag, size = 0x4, scoped, tag = 'scoped memory for tpu_custom_call.1']
  #allocation4 [shape = 'u8[512]{0}', space=smem, size = 0x200, scoped, tag = 'prefetched SMEM operand 0']
  #allocation5 [shape = 'u8[512]{0}', space=smem, size = 0x200, scoped, tag = 'prefetched SMEM operand 1']
  #allocation6 [shape = 'u8[512]{0}', space=smem, size = 0x200, scoped, tag = 'prefetched SMEM operand 2']
  %s0 = inlined_call_operand.hbm [shape: s32[3], index: 0, kind: input, shape index: {}]
  %s1 = inlined_call_operand.hbm [shape: s32[3], index: 1, kind: input, shape index: {}]
  %s2 = inlined_call_operand.vmem [shape: s32[3], index: 2, kind: input, shape index: {}]
  %s3 = inlined_call_operand.hbm [shape: f32[8,128], index: 3, kind: input, shape index: {}]
  %s4 = inlined_call_operand.hbm [shape: f32[3,128,128], index: 4, kind: input, shape index: {}]
  %s5 = inlined_call_operand.vmem [shape: f32[3,1,128], index: 5, kind: input, shape index: {}]
  %s6 = inlined_call_operand.hbm [shape: f32[8,128], index: 6, kind: output, shape index: {}]
  %s7 = sld [smem:[#allocation0]]
  $region69: #{tpu_custom_call.1} parent=0
    _
  %s9 = ssub.s32 1, %s7
  %s10 = scalar_select 0, %s9, %s7
  %s12 = sshll.u32 %s0, 4
  %s13 = int_to_ptr.hbm [resolvable:$true] %s12
  %15 = dma.hbm_to_smem %s13, 16, [#allocation4], [#allocation3]
  %s17 = sshll.u32 %s1, 4
  %s18 = int_to_ptr.hbm [resolvable:$true] %s17
  %20 = dma.hbm_to_smem %s18, 16, [#allocation5], [#allocation3]
  %s22 = sshll.u32 %s2, 4
  %s23 = int_to_ptr.vmem [resolvable:$true] %s22
  %25 = dma.vmem_to_smem %s23, 16, [#allocation6], [#allocation3]
  %27 = dma.done [#allocation3], 48
  %28 = sfence
  $region1: #{tpu_custom_call.1} parent=0
    #allocation7 [shape = 'u8[4096]{0}', space=vmem, size = 0x1000, scoped, tag = 'input window, operand 3, single buffered']
    #allocation8 [shape = 's32[2]{0}', space=sflag, size = 0x8, scoped, tag = 'scoped memory for tpu_custom_call.1']
    #allocation9 [shape = 's32[2]{0}', space=sflag, size = 0x8, scoped, tag = 'scoped memory for tpu_custom_call.1']
    #allocation10 [shape = 'u8[131072]{0}', space=vmem, size = 0x20000, scoped, tag = 'input window, operand 4']
    #allocation11 [shape = 's32[2]{0}', space=sflag, size = 0x8, scoped, tag = 'scoped memory for tpu_custom_call.1']
    #allocation12 [shape = 'u8[4096]{0}', space=vmem, size = 0x1000, scoped, tag = 'output window, operand 0, single buffered']
    %29 = vsyncpa [#allocation8], 0
    %30 = vsyncpa [#allocation11], 0
    %s31 = scalar_lea.sflag [#allocation11], 1
    %32 = vsyncpa %s31, 0
    %33 = vsyncpa [#allocation9], 0
    loop: start=0, step=1, limit=5
    $region2: #{tpu_custom_call.1} parent=1 // loop_pre_header
      _
    $region3: #{tpu_custom_call.1} parent=1 // loop_header
      %s35 = sphi 0, %s39
      %p36 = scmp.ge.s32.totalorder %s35, 5
      %s42 = sphi 0, %s61
      %s43 = sphi 0, %s57
      %s44 = sphi 0, %s53
      %s45 = sphi 0, %s42
      %s46 = sphi 0, %s43
      %s47 = sphi 0, %s44
      %s48 = sphi 0, %s45
      %s49 = sphi 0, %s46
      %s50 = sphi 0, %s47
      %s66 = sphi 0, %s68
      %s69 = sphi 0, %s66
      %s70 = sphi 0, %s69
      %s86 = sphi 0, %s70
      %s100 = sphi 0, %s102
      %s103 = sphi 0, %s100
      %s104 = sphi 0, %s103
      %s120 = sphi 0, %s104
      %s132 = sphi 0, %s134
      %s135 = sphi 0, %s132
      %s136 = sphi 0, %s135
      %s152 = sphi 0, %s136
      %s158 = sphi 0, %s160
      %s161 = sphi 0, %s158
      %s162 = sphi 0, %s161
      %s178 = sphi 0, %s162
    $region4: #{tpu_custom_call.1} parent=1 // loop_header_branch
      %38 = sbr.rel (%p36) target = $region8
    $region5: #{tpu_custom_call.1} parent=1 // loop_body
      %s40 = ssub.s32 %s35, 1
      %s41 = ssub.s32 %s35, 2
      %s51 = sadd.s32 1, %s44
      %p52 = scmp.ge.s32.totalorder %s51, 1
      %s53 = scalar_select %p52, 0, %s51
      %s54 = sadd.s32 1, %s43
      %s55 = scalar_select %p52, %s54, %s43
      %p56 = scmp.ge.s32.totalorder %s55, 3
      %s57 = scalar_select %p56, 0, %s55
      %s58 = sadd.s32 1, %s42
      %s59 = scalar_select %p56, %s58, %s42
      %p60 = scmp.ge.s32.totalorder %s59, 1
      %s61 = scalar_select %p60, 0, %s59
      %s62 = ssub.s32 %s42, %s61
      %s63 = ssub.s32 %s44, %s53
      %s64 = sor.u32 %s62, %s63
      %p65 = scmp.eq.s32.totalorder %s64, 0
      %s67 = sadd.s32 %s66, 1
      %s68 = scalar_select %p65, %s66, %s67
      %p71 = pneg %p65
      %p72 = scmp.eq.s32.totalorder %s35, 2
      %p73 = por %p71, %p72
      %p74 = scmp.ne.s32.totalorder %s66, %s69
      %p75 = scmp.eq.s32.totalorder %s35, 0
      %p76 = por %p74, %p75
      %p77 = scmp.ne.s32.totalorder %s66, %s69
      %p78 = scmp.eq.s32.totalorder %s40, 2
      %p79 = por %p77, %p78
      %p80 = scmp.ne.s32.totalorder %s69, %s70
      %p81 = scmp.eq.s32.totalorder %s40, 0
      %p82 = por %p80, %p81
      %p83 = scmp.ne.s32.totalorder %s69, %s70
      %p84 = scmp.eq.s32.totalorder %s41, 2
      %p85 = por %p83, %p84
      %p87 = scmp.ne.s32.totalorder %s70, %s86
      %p88 = scmp.eq.s32.totalorder %s41, 0
      %p89 = por %p87, %p88
      %s90 = smul.u32 %s42, 3
      %s91 = sadd.s32 %s90, %s43
      %s92 = sld [smem:[#allocation4 + %s91]]
      %s93 = smul.u32 %s61, 3
      %s94 = sadd.s32 %s93, %s57
      %s95 = sld [smem:[#allocation4 + %s94]]
      %s96 = ssub.s32 %s92, %s95
      %s97 = ssub.s32 %s44, %s53
      %s98 = sor.u32 %s96, %s97
      %p99 = scmp.eq.s32.totalorder %s98, 0
      %s101 = sadd.s32 %s100, 1
      %s102 = scalar_select %p99, %s100, %s101
      %p105 = pneg %p99
      %p106 = scmp.eq.s32.totalorder %s35, 2
      %p107 = por %p105, %p106
      %p108 = scmp.ne.s32.totalorder %s100, %s103
      %p109 = scmp.eq.s32.totalorder %s35, 0
      %p110 = por %p108, %p109
      %p111 = scmp.ne.s32.totalorder %s100, %s103
      %p112 = scmp.eq.s32.totalorder %s40, 2
      %p113 = por %p111, %p112
      %p114 = scmp.ne.s32.totalorder %s103, %s104
      %p115 = scmp.eq.s32.totalorder %s40, 0
      %p116 = por %p114, %p115
      %p117 = scmp.ne.s32.totalorder %s103, %s104
      %p118 = scmp.eq.s32.totalorder %s41, 2
      %p119 = por %p117, %p118
      %p121 = scmp.ne.s32.totalorder %s104, %s120
      %p122 = scmp.eq.s32.totalorder %s41, 0
      %p123 = por %p121, %p122
      %s124 = smul.u32 %s42, 3
      %s125 = sadd.s32 %s124, %s43
      %s126 = sld [smem:[#allocation4 + %s125]]
      %s127 = smul.u32 %s61, 3
      %s128 = sadd.s32 %s127, %s57
      %s129 = sld [smem:[#allocation4 + %s128]]
      %s130 = ssub.s32 %s126, %s129
      %p131 = scmp.eq.s32.totalorder %s130, 0
      %s133 = sadd.s32 %s132, 1
      %s134 = scalar_select %p131, %s132, %s133
      %p137 = pneg %p131
      %p138 = scmp.eq.s32.totalorder %s35, 2
      %p139 = por %p137, %p138
      %p140 = scmp.ne.s32.totalorder %s132, %s135
      %p141 = scmp.eq.s32.totalorder %s35, 0
      %p142 = por %p140, %p141
      %p143 = scmp.ne.s32.totalorder %s132, %s135
      %p144 = scmp.eq.s32.totalorder %s40, 2
      %p145 = por %p143, %p144
      %p146 = scmp.ne.s32.totalorder %s135, %s136
      %p147 = scmp.eq.s32.totalorder %s40, 0
      %p148 = por %p146, %p147
      %p149 = scmp.ne.s32.totalorder %s135, %s136
      %p150 = scmp.eq.s32.totalorder %s41, 2
      %p151 = por %p149, %p150
      %p153 = scmp.ne.s32.totalorder %s136, %s152
      %p154 = scmp.eq.s32.totalorder %s41, 0
      %p155 = por %p153, %p154
      %s156 = ssub.s32 %s42, %s61
      %p157 = scmp.eq.s32.totalorder %s156, 0
      %s159 = sadd.s32 %s158, 1
      %s160 = scalar_select %p157, %s158, %s159
      %p163 = pneg %p157
      %p164 = scmp.eq.s32.totalorder %s35, 2
      %p165 = por %p163, %p164
      %p166 = scmp.ne.s32.totalorder %s158, %s161
      %p167 = scmp.eq.s32.totalorder %s35, 0
      %p168 = por %p166, %p167
      %p169 = scmp.ne.s32.totalorder %s158, %s161
      %p170 = scmp.eq.s32.totalorder %s40, 2
      %p171 = por %p169, %p170
      %p172 = scmp.ne.s32.totalorder %s161, %s162
      %p173 = scmp.eq.s32.totalorder %s40, 0
      %p174 = por %p172, %p173
      %p175 = scmp.ne.s32.totalorder %s161, %s162
      %p176 = scmp.eq.s32.totalorder %s41, 2
      %p177 = por %p175, %p176
      %p179 = scmp.ne.s32.totalorder %s162, %s178
      %p180 = scmp.eq.s32.totalorder %s41, 0
      %p181 = por %p179, %p180
      %p182 = scmp.le.s32.totalorder 1, %s35
      %p183 = scmp.lt.s32.totalorder %s35, 4
      %p184 = pnand %p182, %p183
      %p185 = pneg %p184
      // Predicated region
      $region9: #{tpu_custom_call.1} parent=5 // pred_check
        _
      $region10: #{tpu_custom_call.1} parent=5 // pred_check_branch
        %187 = sbr.rel (%p184) target = $region12
      $region11: #{tpu_custom_call.1} parent=5 // pred_region
        %s188 = ssub.s32 %s35, 1
        // Predicated region
        $region13: #{tpu_custom_call.1} parent=11 // pred_check
          %p189 = pneg %p82
        $region14: #{tpu_custom_call.1} parent=11 // pred_check_branch
          %191 = sbr.rel (%p189) target = $region16
        $region15: #{tpu_custom_call.1} parent=11 // pred_region
          %193 = vsyncadd [#allocation8], 0
          %s194 = sadd.s32 %s47, %s45
          %s195 = smul.addr %s194, 8
          %s196 = scalar_lea.hbm %s3, %s195
          %s198 = sshll.u32 %s196, 4
          %s199 = int_to_ptr.hbm [resolvable:$true] %s198
          %s200 = sshll.u32 [#allocation7], 4
          %s201 = int_to_ptr.vmem [resolvable:$true] %s200
          %203 = dma.hbm_to_vmem [thread:$0]  %s199, 128, %s201, [#allocation8]
        $region16: #{tpu_custom_call.1} parent=11 // pred_fallthru
          _
      $region12: #{tpu_custom_call.1} parent=5 // pred_fallthru
        _
      %p204 = scmp.lt.s32.totalorder %s35, 3
      // Predicated region
      $region17: #{tpu_custom_call.1} parent=5 // pred_check
        %p205 = pneg %p204
      $region18: #{tpu_custom_call.1} parent=5 // pred_check_branch
        %207 = sbr.rel (%p205) target = $region20
      $region19: #{tpu_custom_call.1} parent=5 // pred_region
        // Predicated region
        $region21: #{tpu_custom_call.1} parent=19 // pred_check
          %p208 = pneg %p110
        $region22: #{tpu_custom_call.1} parent=19 // pred_check_branch
          %210 = sbr.rel (%p208) target = $region24
        $region23: #{tpu_custom_call.1} parent=19 // pred_region
          %s211 = sand.u32 %s100, 1
          %s212 = scalar_lea.sflag [#allocation11], %s211
          %s213 = sand.u32 %s100, 1
          %s214 = smul.addr %s213, 128
          %s215 = scalar_lea.vmem [#allocation10], %s214
          %s216 = smul.u32 %s42, 3
          %s217 = sadd.s32 %s216, %s43
          %s218 = sld [smem:[#allocation4 + %s217]]
          %s219 = smul.u32 16, %s44
          %221 = vsyncadd %s212, 0
          %s222 = smul.addr %s218, 16
          %s223 = sadd.s32 %s219, %s222
          %s224 = smul.addr %s223, 8
          %s225 = scalar_lea.hbm %s4, %s224
          %s226 = sshll.u32 %s225, 4
          %s227 = int_to_ptr.hbm [resolvable:$true] %s226
          %s228 = sshll.u32 %s215, 4
          %s229 = int_to_ptr.vmem [resolvable:$true] %s228
          %234 = dma.hbm_to_vmem [thread:$0]  %s227, 2048, %s229, %s212, 128, 128, 8
        $region24: #{tpu_custom_call.1} parent=19 // pred_fallthru
          _
        // Predicated region
        $region25: #{tpu_custom_call.1} parent=19 // pred_check
          %p235 = pneg %p142
        $region26: #{tpu_custom_call.1} parent=19 // pred_check_branch
          %237 = sbr.rel (%p235) target = $region28
        $region27: #{tpu_custom_call.1} parent=19 // pred_region
          %s238 = smul.u32 %s42, 3
          %s239 = sadd.s32 %s238, %s43
          %s240 = sld [smem:[#allocation4 + %s239]]
          %p241 = scmp.lt.s32.totalorder %s240, 2
          %s242 = scalar_select %p241, %s240, 2
          %s243 = scalar_lea.vmem %s5, %s242
          %s244 = smul.u32 %s42, 3
          %s245 = sadd.s32 %s244, %s43
          %s246 = sld [smem:[#allocation4 + %s245]]
        $region28: #{tpu_custom_call.1} parent=19 // pred_fallthru
          _
      $region20: #{tpu_custom_call.1} parent=5 // pred_fallthru
        _
      %p247 = scmp.le.s32.totalorder 1, %s35
      %p248 = scmp.lt.s32.totalorder %s35, 4
      %p249 = pnand %p247, %p248
      %p250 = pneg %p249
      // Predicated region
      $region29: #{tpu_custom_call.1} parent=5 // pred_check
        _
      $region30: #{tpu_custom_call.1} parent=5 // pred_check_branch
        %252 = sbr.rel (%p249) target = $region32
      $region31: #{tpu_custom_call.1} parent=5 // pred_region
        %s253 = ssub.s32 %s35, 1
        // Predicated region
        $region33: #{tpu_custom_call.1} parent=31 // pred_check
          %p254 = pneg %p82
        $region34: #{tpu_custom_call.1} parent=31 // pred_check_branch
          %256 = sbr.rel (%p254) target = $region36
        $region35: #{tpu_custom_call.1} parent=31 // pred_region
          %258 = dma.done [#allocation8], 128
        $region36: #{tpu_custom_call.1} parent=31 // pred_fallthru
          _
        %s259 = sand.u32 %s103, 1
        %s260 = scalar_lea.sflag [#allocation11], %s259
        %s261 = sand.u32 %s103, 1
        %s262 = smul.addr %s261, 128
        %s263 = scalar_lea.vmem [#allocation10], %s262
        // Predicated region
        $region37: #{tpu_custom_call.1} parent=31 // pred_check
          %p264 = pneg %p116
        $region38: #{tpu_custom_call.1} parent=31 // pred_check_branch
          %266 = sbr.rel (%p264) target = $region40
        $region39: #{tpu_custom_call.1} parent=31 // pred_region
          %268 = dma.done %s260, 2048
        $region40: #{tpu_custom_call.1} parent=31 // pred_fallthru
          _
        %p269 = pneg %p82
        %p270 = pneg %p79
        %s271 = sand.u32 %s103, 1
        %s272 = scalar_lea.sflag [#allocation11], %s271
        %s273 = sand.u32 %s103, 1
        %s274 = smul.addr %s273, 128
        %s275 = scalar_lea.vmem [#allocation10], %s274
        %p276 = pneg %p116
        %p277 = pneg %p113
        %s278 = smul.u32 %s45, 3
        %s279 = sadd.s32 %s278, %s46
        %s280 = sld [smem:[#allocation4 + %s279]]
        %p281 = scmp.lt.s32.totalorder %s280, 2
        %s282 = scalar_select %p281, %s280, 2
        %s283 = scalar_lea.vmem %s5, %s282
        %p284 = pneg %p148
        %p285 = pneg %p145
        %p286 = pneg %p174
        %p287 = pneg %p171
        %s288 = smul.u32 %s45, 3
        %s289 = sadd.s32 %s288, %s46
        %s290 = sld [smem:[#allocation4 + %s289]]
        %s291 = smul.u32 16, %s47
        %s292 = smul.u32 %s45, 3
        %s293 = sadd.s32 %s292, %s46
        %s294 = sld [smem:[#allocation4 + %s293]]
        %p295 = scmp.lt.s32.totalorder %s294, 2
        %s296 = scalar_select %p295, %s294, 2
        %s297 = scalar_lea.vmem %s5, %s296
        %s298 = smul.u32 %s45, 3
        %s299 = sadd.s32 %s298, %s46
        %s300 = sld [smem:[#allocation4 + %s299]]
        %s301 = smul.u32 %s45, 3
        %s302 = sadd.s32 %s301, %s46
        %s303 = sld [smem:[#allocation6 + %s302]]
        %p304 = scmp.gt.s32.totalorder %s303, 0
        %p305 = scmp.eq.s32.totalorder %s47, 0
        %p306 = scmp.eq.s32.totalorder %s46, 0
        %p307 = pnand %p306, %p305
        %p308 = pneg %p307
        // Predicated region
        $region41: #{tpu_custom_call.1} parent=31 // pred_check
          _
        $region42: #{tpu_custom_call.1} parent=31 // pred_check_branch
          %310 = sbr.rel (%p307) target = $region44
        $region43: #{tpu_custom_call.1} parent=31 // pred_region
          %311 = vst [vmem:[#allocation12] sm:$0xff] 0.0
        $region44: #{tpu_custom_call.1} parent=31 // pred_fallthru
          _
        %p312 = pnand %p304, %p305
        %p313 = pneg %p312
        // Predicated region
        $region45: #{tpu_custom_call.1} parent=31 // pred_check
          _
        $region46: #{tpu_custom_call.1} parent=31 // pred_check_branch
          %315 = sbr.rel (%p312) target = $region48
        $region47: #{tpu_custom_call.1} parent=31 // pred_region
          %316 = vst [vmem:[#allocation2] sm:$0xff] 0.0
        $region48: #{tpu_custom_call.1} parent=31 // pred_fallthru
          _
        // Predicated region
        $region49: #{tpu_custom_call.1} parent=31 // pred_check
          %p317 = pneg %p304
        $region50: #{tpu_custom_call.1} parent=31 // pred_check_branch
          %319 = sbr.rel (%p317) target = $region52
        $region51: #{tpu_custom_call.1} parent=31 // pred_region
          %v320 = vld [vmem:[#allocation2] sm:$0xff]
          %v321 = vld [vmem:[#allocation7] sm:$0xff]
          %v322 = vld [vmem:[%s263] sm:$0xff]
          %v323 = vld [vmem:[%s263 + $0x8] sm:$0xff]
          %v324 = vld [vmem:[%s263 + $0x10] sm:$0xff]
          %v325 = vld [vmem:[%s263 + $0x18] sm:$0xff]
          %v326 = vld [vmem:[%s263 + $0x20] sm:$0xff]
          %v327 = vld [vmem:[%s263 + $0x28] sm:$0xff]
          %v328 = vld [vmem:[%s263 + $0x30] sm:$0xff]
          %v329 = vld [vmem:[%s263 + $0x38] sm:$0xff]
          %v330 = vld [vmem:[%s263 + $0x40] sm:$0xff]
          %v331 = vld [vmem:[%s263 + $0x48] sm:$0xff]
          %v332 = vld [vmem:[%s263 + $0x50] sm:$0xff]
          %v333 = vld [vmem:[%s263 + $0x58] sm:$0xff]
          %v334 = vld [vmem:[%s263 + $0x60] sm:$0xff]
          %v335 = vld [vmem:[%s263 + $0x68] sm:$0xff]
          %v336 = vld [vmem:[%s263 + $0x70] sm:$0xff]
          %v337 = vld [vmem:[%s263 + $0x78] sm:$0xff]
          %338 = vmatpush.msra.mxu0 %v337
          %339 = vmatpush.msra.mxu0 %v336
          %340 = vmatpush.msra.mxu0 %v335
          %341 = vmatpush.msra.mxu0 %v334
          %342 = vmatpush.msra.mxu0 %v333
          %343 = vmatpush.msra.mxu0 %v332
          %344 = vmatpush.msra.mxu0 %v331
          %345 = vmatpush.msra.mxu0 %v330
          %346 = vmatpush.msra.mxu0 %v329
          %347 = vmatpush.msra.mxu0 %v328
          %348 = vmatpush.msra.mxu0 %v327
          %349 = vmatpush.msra.mxu0 %v326
          %350 = vmatpush.msra.mxu0 %v325
          %351 = vmatpush.msra.mxu0 %v324
          %352 = vmatpush.msra.mxu0 %v323
          %353 = vmatpush.msra.mxu0 %v322
          %354 = vmatmul.f32.gmra.mxu0 %v321
          %v355 = vpop.f32.mrf.mxu0
          %v356 = vadd.f32 0.0, %v355
          %357 = vdwg.mxu0
          %v358 = vadd.f32 %v320, %v356
          %359 = vst [vmem:[#allocation2] sm:$0xff] %v358
        $region52: #{tpu_custom_call.1} parent=31 // pred_fallthru
          _
        // Predicated region
        $region53: #{tpu_custom_call.1} parent=31 // pred_check
          _
        $region54: #{tpu_custom_call.1} parent=31 // pred_check_branch
          %361 = sbr.rel (%p312) target = $region56
        $region55: #{tpu_custom_call.1} parent=31 // pred_region
          %v362 = vld [vmem:[#allocation2] sm:$0xff]
          %v363 = vld [vmem:[%s297] sm:$0x1]
          %v365 = vperm.slane %v363, 0
          %v367 = vadd.f32 %v362, %v365
          %s368 = sld [smem:[#allocation5 + %s302]]
          %v369 = vlaneseq
          %v370 = vshrl.u32 %v369, 7
          %v371 = vstv %s368
          %vm372 = vcmp.ge.s32.totalorder %v370, %v371
          %s373 = sadd.s32 %s368, %s303
          %v374 = vstv %s373
          %vm375 = vcmp.lt.s32.totalorder %v370, %v374
          %vm376 = vmand %vm372, %vm375
          %v377 = vld [vmem:[#allocation12] sm:$0xff]
          %v378 = vsel %vm376, %v367, %v377
          %379 = vst [vmem:[#allocation12] sm:$0xff] %v378
        $region56: #{tpu_custom_call.1} parent=31 // pred_fallthru
          _
        // Predicated region
        $region57: #{tpu_custom_call.1} parent=31 // pred_check
          %p380 = pneg %p171
        $region58: #{tpu_custom_call.1} parent=31 // pred_check_branch
          %382 = sbr.rel (%p380) target = $region60
        $region59: #{tpu_custom_call.1} parent=31 // pred_region
          %384 = vsyncadd [#allocation9], 0
          %s385 = smul.addr %s45, 8
          %s386 = scalar_lea.hbm %s6, %s385
          %s388 = sshll.u32 [#allocation12], 4
          %s389 = int_to_ptr.vmem [resolvable:$true] %s388
          %s390 = sshll.u32 %s386, 4
          %s391 = int_to_ptr.hbm [resolvable:$true] %s390
          %393 = dma.vmem_to_hbm [thread:$0]  %s389, 128, %s391, [#allocation9]
        $region60: #{tpu_custom_call.1} parent=31 // pred_fallthru
          _
        // Predicated region
        $region61: #{tpu_custom_call.1} parent=31 // pred_check
          %p394 = pneg %p171
        $region62: #{tpu_custom_call.1} parent=31 // pred_check_branch
          %396 = sbr.rel (%p394) target = $region64
        $region63: #{tpu_custom_call.1} parent=31 // pred_region
          %398 = dma.done [#allocation9], 128
        $region64: #{tpu_custom_call.1} parent=31 // pred_fallthru
          _
      $region32: #{tpu_custom_call.1} parent=5 // pred_fallthru
        _
      %p399 = scmp.le.s32.totalorder 2, %s35
      // Predicated region
      $region65: #{tpu_custom_call.1} parent=5 // pred_check
        %p400 = pneg %p399
      $region66: #{tpu_custom_call.1} parent=5 // pred_check_branch
        %402 = sbr.rel (%p400) target = $region68
      $region67: #{tpu_custom_call.1} parent=5 // pred_region
        %s403 = ssub.s32 %s35, 2
      $region68: #{tpu_custom_call.1} parent=5 // pred_fallthru
        _
    $region6: #{tpu_custom_call.1} parent=1 // loop_footer
      %s39 = sadd.s32 1, %s35
    $region7: #{tpu_custom_call.1} parent=1 // loop_footer_branch
      %34 = sbr.rel target = $region3
    $region8: #{tpu_custom_call.1} parent=1 // loop_exit
      _
    %404 = vsyncpa [#allocation8], 1
    %s405 = scalar_lea.sflag [#allocation8], 1
    %406 = vsyncpa %s405, 1
    %407 = vsyncpa [#allocation11], 1
    %s408 = scalar_lea.sflag [#allocation11], 1
    %409 = vsyncpa %s408, 1
    %410 = vsyncpa [#allocation9], 1
    %s411 = scalar_lea.sflag [#allocation9], 1
    %412 = vsyncpa %s411, 1

</llo_original>
